<compile_context>
chip_gen: v7x
topology: tpu7x:2x2x1
jax: 0.10.0
libtpu: 0.0.40
codegen_flags: <defaults>
</compile_context>

<pallas_src>
import jax
import jax.numpy as jnp
from jax import lax
from jax.experimental import pallas as pl
from jax.experimental.pallas import tpu as pltpu


# ---------------------------------------------------------------------------
# Grid (large-batch) kernel: native (batch, features) layout, MXU matmuls.
# ---------------------------------------------------------------------------
def toy_mp_mxu_kernel(x_ref, w1_ref, b1_ref, w2_ref, b2_ref, o_ref):
    """relu(x @ w1.T + b1) @ w2.T + b2 on a (batch_tile, f_in) block.

    Weights stay in PyTorch (out_features, in_features) layout; the feature
    axis of x is contracted directly against the in_features axis of each
    weight (lax.dot_general), so no transpose is materialized anywhere.
    """
    x = x_ref[...]                                           # (TB, f_in)
    h = lax.dot_general(
        x, w1_ref[...],
        dimension_numbers=(((1,), (1,)), ((), ())),          # x @ w1.T
        preferred_element_type=jnp.float32)                  # (TB, h_dim)
    h = jnp.maximum(h + b1_ref[...], 0.0)                    # b1: (1, h_dim)
    y = lax.dot_general(
        h, w2_ref[...],
        dimension_numbers=(((1,), (1,)), ((), ())),          # h @ w2.T
        preferred_element_type=jnp.float32)                  # (TB, f_out)
    o_ref[...] = (y + b2_ref[...]).astype(o_ref.dtype)       # b2: (1, f_out)


# ---------------------------------------------------------------------------
# Tiny no-grid kernel: transposed (features, batch) layout, VPU MACs.
# ---------------------------------------------------------------------------
def toy_mp_small_kernel(xT_ref, w1_ref, b1_ref, w2_ref, b2_ref, oT_ref):
    """Fused MLP on a (features, batch) tile; all arithmetic stays on the VPU."""
    xT = xT_ref[...].astype(jnp.float32)   # (f_in, B)   batch on the lane axis
    w1 = w1_ref[...].astype(jnp.float32)   # (h_dim, f_in)
    w2 = w2_ref[...].astype(jnp.float32)   # (f_out, h_dim)
    nb = xT.shape[1]

    h = jnp.zeros((w1.shape[0], nb), jnp.float32)
    for k in range(w1.shape[1]):           # K = 10, statically unrolled
        h = h + w1[:, k:k + 1] * xT[k:k + 1, :]
    h = jnp.maximum(h + b1_ref[...], 0.0)

    out = jnp.zeros((w2.shape[0], nb), jnp.float32)
    for k in range(w2.shape[1]):           # K = 10, statically unrolled
        out = out + w2[:, k:k + 1] * h[k:k + 1, :]
    out = out + b2_ref[...]

    oT_ref[...] = out.astype(oT_ref.dtype)  # (f_out, B), lane-dense store


def _round_up(v, m):
    return ((v + m - 1) // m) * m


def toy_mp_forward(x, w1, b1, w2, b2, *, batch_tile=None):
    """ToyMpModel forward: relu(x @ w1.T + b1) @ w2.T + b2.

    x: (B, 10); w1: (10, 10); b1: (10,); w2: (5, 10); b2: (5,) (PyTorch layouts).
    """
    B, f_in = x.shape
    h_dim = w1.shape[0]
    f_out = w2.shape[0]
    itemsize = x.dtype.itemsize

    if batch_tile is None and B < 1024:
        # Tiny problem: no grid, no pipeline machinery; whole problem resident
        # in VMEM and the body runs exactly once.
        vmem = pl.BlockSpec(memory_space=pltpu.MemorySpace.VMEM)
        out_t = pl.pallas_call(
            toy_mp_small_kernel,
            out_shape=jax.ShapeDtypeStruct((f_out, B), x.dtype),
            in_specs=[vmem, vmem, vmem, vmem, vmem],
            out_specs=vmem,
        )(x.T, w1, b1.reshape(h_dim, 1), w2, b2.reshape(f_out, 1))
        return out_t.T

    if batch_tile is None:
        # >=1024 rows/tile (amortize ~0.35us step overhead), <=4096 rows/tile
        # (a (TB, 10) f32 block lane-pads to TB*512 bytes in VMEM), ~B/8 in
        # between so the "parallel" batch axis can feed both v7x TensorCores.
        batch_tile = min(max(_round_up(pl.cdiv(B, 8), 128), 1024), 4096)
    assert batch_tile % 8 == 0, "batch_tile must be a multiple of 8 (sublanes)"

    num_tiles = pl.cdiv(B, batch_tile)  # ragged last block: OOB writes dropped

    cost = pl.CostEstimate(
        flops=int(2 * B * (f_in * h_dim + h_dim * f_out)),
        transcendentals=0,
        bytes_accessed=int(
            (B * (f_in + f_out) + w1.size + b1.size + w2.size + b2.size)
            * itemsize),
    )

    return pl.pallas_call(
        toy_mp_mxu_kernel,
        out_shape=jax.ShapeDtypeStruct((B, f_out), x.dtype),
        grid=(num_tiles,),
        in_specs=[
            pl.BlockSpec((batch_tile, f_in), lambda i: (i, 0)),
            pl.BlockSpec((h_dim, f_in), lambda i: (0, 0)),
            pl.BlockSpec((1, h_dim), lambda i: (0, 0)),
            pl.BlockSpec((f_out, h_dim), lambda i: (0, 0)),
            pl.BlockSpec((1, f_out), lambda i: (0, 0)),
        ],
        out_specs=pl.BlockSpec((batch_tile, f_out), lambda i: (i, 0)),
        compiler_params=pltpu.CompilerParams(
            dimension_semantics=("parallel",),   # independent batch tiles
            vmem_limit_bytes=32 * 1024 * 1024,   # explicit budget (v7x-safe)
        ),
        cost_estimate=cost,
    )(x, w1, b1.reshape(1, h_dim), w2, b2.reshape(1, f_out))


def init_params(key):
    # Mimic torch.nn.Linear init: U(-1/sqrt(fan_in), 1/sqrt(fan_in)), fan_in=10.
    k1, k2, k3, k4 = jax.random.split(key, 4)
    bound = 1.0 / (10.0 ** 0.5)
    w1 = jax.random.uniform(k1, (10, 10), jnp.float32, -bound, bound)  # (out, in)
    b1 = jax.random.uniform(k2, (10,), jnp.float32, -bound, bound)
    w2 = jax.random.uniform(k3, (5, 10), jnp.float32, -bound, bound)   # (out, in)
    b2 = jax.random.uniform(k4, (5,), jnp.float32, -bound, bound)
    return w1, b1, w2, b2


def reference(x, w1, b1, w2, b2):
    h = jnp.maximum(
        jnp.dot(x, w1.T, precision=jax.lax.Precision.HIGHEST) + b1, 0.0)
    return jnp.dot(h, w2.T, precision=jax.lax.Precision.HIGHEST) + b2


if __name__ == "__main__":
    key = jax.random.PRNGKey(0)
    kx1, kx2, kx3, kp = jax.random.split(key, 4)
    w1, b1, w2, b2 = init_params(kp)

    # 1) Tiny no-grid path (whole problem resident in VMEM, VPU MACs).
    x_small = jax.random.normal(kx1, (8, 10), jnp.float32)
    out_small = jax.block_until_ready(toy_mp_forward(x_small, w1, b1, w2, b2))
    assert out_small.shape == (8, 5)
    assert jnp.allclose(out_small, reference(x_small, w1, b1, w2, b2),
                        atol=1e-5, rtol=1e-5)

    # MXU f32 matmuls may be computed via bf16 passes depending on the default
    # matmul precision, so the batch-tiled path uses a looser tolerance.
    TOL = dict(atol=2e-2, rtol=2e-2)

    # 2) Batch-tiled MXU path, batch divisible by the tile (forced small tile
    #    just to exercise the multi-step grid at small test shapes).
    x_grid = jax.random.normal(kx2, (512, 10), jnp.float32)
    out_grid = jax.block_until_ready(
        toy_mp_forward(x_grid, w1, b1, w2, b2, batch_tile=128))
    assert out_grid.shape == (512, 5)
    assert jnp.allclose(out_grid, reference(x_grid, w1, b1, w2, b2), **TOL)

    # 3) Batch-tiled MXU path, ragged last block (no jnp.pad; OOB rows dropped).
    x_rag = jax.random.normal(kx3, (200, 10), jnp.float32)
    out_rag = jax.block_until_ready(
        toy_mp_forward(x_rag, w1, b1, w2, b2, batch_tile=128))
    assert out_rag.shape == (200, 5)
    assert jnp.allclose(out_rag, reference(x_rag, w1, b1, w2, b2), **TOL)

    print("KERNEL_OK")
</pallas_src>

<mosaic_0001>
module attributes {stable_mosaic.version = 11 : i64} {
  func.func @toy_mp_small_kernel(%arg0: memref<10x8xf32, #tpu.memory_space<vmem>>, %arg1: memref<10x10xf32, #tpu.memory_space<vmem>>, %arg2: memref<10x1xf32, #tpu.memory_space<vmem>>, %arg3: memref<5x10xf32, #tpu.memory_space<vmem>>, %arg4: memref<5x1xf32, #tpu.memory_space<vmem>>, %arg5: memref<5x8xf32, #tpu.memory_space<vmem>>) attributes {dimension_semantics = [], scalar_prefetch = 0 : i64, scratch_operands = 0 : i64, tpu.core_type = #tpu.core_type<tc>} {
    %c0 = arith.constant 0 : index
    %c0_0 = arith.constant 0 : index
    %0 = vector.load %arg0[%c0, %c0_0] : memref<10x8xf32, #tpu.memory_space<vmem>>, vector<10x8xf32>
    %c0_1 = arith.constant 0 : index
    %c0_2 = arith.constant 0 : index
    %1 = vector.load %arg1[%c0_1, %c0_2] : memref<10x10xf32, #tpu.memory_space<vmem>>, vector<10x10xf32>
    %c0_3 = arith.constant 0 : index
    %c0_4 = arith.constant 0 : index
    %2 = vector.load %arg3[%c0_3, %c0_4] : memref<5x10xf32, #tpu.memory_space<vmem>>, vector<5x10xf32>
    %cst = arith.constant 0.000000e+00 : f32
    %3 = vector.broadcast %cst : f32 to vector<10x8xf32>
    %4 = vector.extract_strided_slice %1 {offsets = [0, 0], sizes = [10, 1], strides = [1, 1]} : vector<10x10xf32> to vector<10x1xf32>
    %5 = vector.extract_strided_slice %0 {offsets = [0, 0], sizes = [1, 8], strides = [1, 1]} : vector<10x8xf32> to vector<1x8xf32>
    %6 = vector.broadcast %4 : vector<10x1xf32> to vector<10x8xf32>
    %7 = vector.broadcast %5 : vector<1x8xf32> to vector<10x8xf32>
    %8 = arith.mulf %6, %7 : vector<10x8xf32>
    %9 = arith.addf %3, %8 : vector<10x8xf32>
    %10 = vector.extract_strided_slice %1 {offsets = [0, 1], sizes = [10, 1], strides = [1, 1]} : vector<10x10xf32> to vector<10x1xf32>
    %11 = vector.extract_strided_slice %0 {offsets = [1, 0], sizes = [1, 8], strides = [1, 1]} : vector<10x8xf32> to vector<1x8xf32>
    %12 = vector.broadcast %10 : vector<10x1xf32> to vector<10x8xf32>
    %13 = vector.broadcast %11 : vector<1x8xf32> to vector<10x8xf32>
    %14 = arith.mulf %12, %13 : vector<10x8xf32>
    %15 = arith.addf %9, %14 : vector<10x8xf32>
    %16 = vector.extract_strided_slice %1 {offsets = [0, 2], sizes = [10, 1], strides = [1, 1]} : vector<10x10xf32> to vector<10x1xf32>
    %17 = vector.extract_strided_slice %0 {offsets = [2, 0], sizes = [1, 8], strides = [1, 1]} : vector<10x8xf32> to vector<1x8xf32>
    %18 = vector.broadcast %16 : vector<10x1xf32> to vector<10x8xf32>
    %19 = vector.broadcast %17 : vector<1x8xf32> to vector<10x8xf32>
    %20 = arith.mulf %18, %19 : vector<10x8xf32>
    %21 = arith.addf %15, %20 : vector<10x8xf32>
    %22 = vector.extract_strided_slice %1 {offsets = [0, 3], sizes = [10, 1], strides = [1, 1]} : vector<10x10xf32> to vector<10x1xf32>
    %23 = vector.extract_strided_slice %0 {offsets = [3, 0], sizes = [1, 8], strides = [1, 1]} : vector<10x8xf32> to vector<1x8xf32>
    %24 = vector.broadcast %22 : vector<10x1xf32> to vector<10x8xf32>
    %25 = vector.broadcast %23 : vector<1x8xf32> to vector<10x8xf32>
    %26 = arith.mulf %24, %25 : vector<10x8xf32>
    %27 = arith.addf %21, %26 : vector<10x8xf32>
    %28 = vector.extract_strided_slice %1 {offsets = [0, 4], sizes = [10, 1], strides = [1, 1]} : vector<10x10xf32> to vector<10x1xf32>
    %29 = vector.extract_strided_slice %0 {offsets = [4, 0], sizes = [1, 8], strides = [1, 1]} : vector<10x8xf32> to vector<1x8xf32>
    %30 = vector.broadcast %28 : vector<10x1xf32> to vector<10x8xf32>
    %31 = vector.broadcast %29 : vector<1x8xf32> to vector<10x8xf32>
    %32 = arith.mulf %30, %31 : vector<10x8xf32>
    %33 = arith.addf %27, %32 : vector<10x8xf32>
    %34 = vector.extract_strided_slice %1 {offsets = [0, 5], sizes = [10, 1], strides = [1, 1]} : vector<10x10xf32> to vector<10x1xf32>
    %35 = vector.extract_strided_slice %0 {offsets = [5, 0], sizes = [1, 8], strides = [1, 1]} : vector<10x8xf32> to vector<1x8xf32>
    %36 = vector.broadcast %34 : vector<10x1xf32> to vector<10x8xf32>
    %37 = vector.broadcast %35 : vector<1x8xf32> to vector<10x8xf32>
    %38 = arith.mulf %36, %37 : vector<10x8xf32>
    %39 = arith.addf %33, %38 : vector<10x8xf32>
    %40 = vector.extract_strided_slice %1 {offsets = [0, 6], sizes = [10, 1], strides = [1, 1]} : vector<10x10xf32> to vector<10x1xf32>
    %41 = vector.extract_strided_slice %0 {offsets = [6, 0], sizes = [1, 8], strides = [1, 1]} : vector<10x8xf32> to vector<1x8xf32>
    %42 = vector.broadcast %40 : vector<10x1xf32> to vector<10x8xf32>
    %43 = vector.broadcast %41 : vector<1x8xf32> to vector<10x8xf32>
    %44 = arith.mulf %42, %43 : vector<10x8xf32>
    %45 = arith.addf %39, %44 : vector<10x8xf32>
    %46 = vector.extract_strided_slice %1 {offsets = [0, 7], sizes = [10, 1], strides = [1, 1]} : vector<10x10xf32> to vector<10x1xf32>
    %47 = vector.extract_strided_slice %0 {offsets = [7, 0], sizes = [1, 8], strides = [1, 1]} : vector<10x8xf32> to vector<1x8xf32>
    %48 = vector.broadcast %46 : vector<10x1xf32> to vector<10x8xf32>
    %49 = vector.broadcast %47 : vector<1x8xf32> to vector<10x8xf32>
    %50 = arith.mulf %48, %49 : vector<10x8xf32>
    %51 = arith.addf %45, %50 : vector<10x8xf32>
    %52 = vector.extract_strided_slice %1 {offsets = [0, 8], sizes = [10, 1], strides = [1, 1]} : vector<10x10xf32> to vector<10x1xf32>
    %53 = vector.extract_strided_slice %0 {offsets = [8, 0], sizes = [1, 8], strides = [1, 1]} : vector<10x8xf32> to vector<1x8xf32>
    %54 = vector.broadcast %52 : vector<10x1xf32> to vector<10x8xf32>
    %55 = vector.broadcast %53 : vector<1x8xf32> to vector<10x8xf32>
    %56 = arith.mulf %54, %55 : vector<10x8xf32>
    %57 = arith.addf %51, %56 : vector<10x8xf32>
    %58 = vector.extract_strided_slice %1 {offsets = [0, 9], sizes = [10, 1], strides = [1, 1]} : vector<10x10xf32> to vector<10x1xf32>
    %59 = vector.extract_strided_slice %0 {offsets = [9, 0], sizes = [1, 8], strides = [1, 1]} : vector<10x8xf32> to vector<1x8xf32>
    %60 = vector.broadcast %58 : vector<10x1xf32> to vector<10x8xf32>
    %61 = vector.broadcast %59 : vector<1x8xf32> to vector<10x8xf32>
    %62 = arith.mulf %60, %61 : vector<10x8xf32>
    %63 = arith.addf %57, %62 : vector<10x8xf32>
    %c0_5 = arith.constant 0 : index
    %c0_6 = arith.constant 0 : index
    %64 = vector.load %arg2[%c0_5, %c0_6] : memref<10x1xf32, #tpu.memory_space<vmem>>, vector<10x1xf32>
    %65 = vector.broadcast %64 : vector<10x1xf32> to vector<10x8xf32>
    %66 = arith.addf %63, %65 : vector<10x8xf32>
    %cst_7 = arith.constant 0.000000e+00 : f32
    %67 = vector.broadcast %cst_7 : f32 to vector<10x8xf32>
    %68 = arith.maximumf %66, %67 : vector<10x8xf32>
    %cst_8 = arith.constant 0.000000e+00 : f32
    %69 = vector.broadcast %cst_8 : f32 to vector<5x8xf32>
    %70 = vector.extract_strided_slice %2 {offsets = [0, 0], sizes = [5, 1], strides = [1, 1]} : vector<5x10xf32> to vector<5x1xf32>
    %71 = vector.extract_strided_slice %68 {offsets = [0, 0], sizes = [1, 8], strides = [1, 1]} : vector<10x8xf32> to vector<1x8xf32>
    %72 = vector.broadcast %70 : vector<5x1xf32> to vector<5x8xf32>
    %73 = vector.broadcast %71 : vector<1x8xf32> to vector<5x8xf32>
    %74 = arith.mulf %72, %73 : vector<5x8xf32>
    %75 = arith.addf %69, %74 : vector<5x8xf32>
    %76 = vector.extract_strided_slice %2 {offsets = [0, 1], sizes = [5, 1], strides = [1, 1]} : vector<5x10xf32> to vector<5x1xf32>
    %77 = vector.extract_strided_slice %68 {offsets = [1, 0], sizes = [1, 8], strides = [1, 1]} : vector<10x8xf32> to vector<1x8xf32>
    %78 = vector.broadcast %76 : vector<5x1xf32> to vector<5x8xf32>
    %79 = vector.broadcast %77 : vector<1x8xf32> to vector<5x8xf32>
    %80 = arith.mulf %78, %79 : vector<5x8xf32>
    %81 = arith.addf %75, %80 : vector<5x8xf32>
    %82 = vector.extract_strided_slice %2 {offsets = [0, 2], sizes = [5, 1], strides = [1, 1]} : vector<5x10xf32> to vector<5x1xf32>
    %83 = vector.extract_strided_slice %68 {offsets = [2, 0], sizes = [1, 8], strides = [1, 1]} : vector<10x8xf32> to vector<1x8xf32>
    %84 = vector.broadcast %82 : vector<5x1xf32> to vector<5x8xf32>
    %85 = vector.broadcast %83 : vector<1x8xf32> to vector<5x8xf32>
    %86 = arith.mulf %84, %85 : vector<5x8xf32>
    %87 = arith.addf %81, %86 : vector<5x8xf32>
    %88 = vector.extract_strided_slice %2 {offsets = [0, 3], sizes = [5, 1], strides = [1, 1]} : vector<5x10xf32> to vector<5x1xf32>
    %89 = vector.extract_strided_slice %68 {offsets = [3, 0], sizes = [1, 8], strides = [1, 1]} : vector<10x8xf32> to vector<1x8xf32>
    %90 = vector.broadcast %88 : vector<5x1xf32> to vector<5x8xf32>
    %91 = vector.broadcast %89 : vector<1x8xf32> to vector<5x8xf32>
    %92 = arith.mulf %90, %91 : vector<5x8xf32>
    %93 = arith.addf %87, %92 : vector<5x8xf32>
    %94 = vector.extract_strided_slice %2 {offsets = [0, 4], sizes = [5, 1], strides = [1, 1]} : vector<5x10xf32> to vector<5x1xf32>
    %95 = vector.extract_strided_slice %68 {offsets = [4, 0], sizes = [1, 8], strides = [1, 1]} : vector<10x8xf32> to vector<1x8xf32>
    %96 = vector.broadcast %94 : vector<5x1xf32> to vector<5x8xf32>
    %97 = vector.broadcast %95 : vector<1x8xf32> to vector<5x8xf32>
    %98 = arith.mulf %96, %97 : vector<5x8xf32>
    %99 = arith.addf %93, %98 : vector<5x8xf32>
    %100 = vector.extract_strided_slice %2 {offsets = [0, 5], sizes = [5, 1], strides = [1, 1]} : vector<5x10xf32> to vector<5x1xf32>
    %101 = vector.extract_strided_slice %68 {offsets = [5, 0], sizes = [1, 8], strides = [1, 1]} : vector<10x8xf32> to vector<1x8xf32>
    %102 = vector.broadcast %100 : vector<5x1xf32> to vector<5x8xf32>
    %103 = vector.broadcast %101 : vector<1x8xf32> to vector<5x8xf32>
    %104 = arith.mulf %102, %103 : vector<5x8xf32>
    %105 = arith.addf %99, %104 : vector<5x8xf32>
    %106 = vector.extract_strided_slice %2 {offsets = [0, 6], sizes = [5, 1], strides = [1, 1]} : vector<5x10xf32> to vector<5x1xf32>
    %107 = vector.extract_strided_slice %68 {offsets = [6, 0], sizes = [1, 8], strides = [1, 1]} : vector<10x8xf32> to vector<1x8xf32>
    %108 = vector.broadcast %106 : vector<5x1xf32> to vector<5x8xf32>
    %109 = vector.broadcast %107 : vector<1x8xf32> to vector<5x8xf32>
    %110 = arith.mulf %108, %109 : vector<5x8xf32>
    %111 = arith.addf %105, %110 : vector<5x8xf32>
    %112 = vector.extract_strided_slice %2 {offsets = [0, 7], sizes = [5, 1], strides = [1, 1]} : vector<5x10xf32> to vector<5x1xf32>
    %113 = vector.extract_strided_slice %68 {offsets = [7, 0], sizes = [1, 8], strides = [1, 1]} : vector<10x8xf32> to vector<1x8xf32>
    %114 = vector.broadcast %112 : vector<5x1xf32> to vector<5x8xf32>
    %115 = vector.broadcast %113 : vector<1x8xf32> to vector<5x8xf32>
    %116 = arith.mulf %114, %115 : vector<5x8xf32>
    %117 = arith.addf %111, %116 : vector<5x8xf32>
    %118 = vector.extract_strided_slice %2 {offsets = [0, 8], sizes = [5, 1], strides = [1, 1]} : vector<5x10xf32> to vector<5x1xf32>
    %119 = vector.extract_strided_slice %68 {offsets = [8, 0], sizes = [1, 8], strides = [1, 1]} : vector<10x8xf32> to vector<1x8xf32>
    %120 = vector.broadcast %118 : vector<5x1xf32> to vector<5x8xf32>
    %121 = vector.broadcast %119 : vector<1x8xf32> to vector<5x8xf32>
    %122 = arith.mulf %120, %121 : vector<5x8xf32>
    %123 = arith.addf %117, %122 : vector<5x8xf32>
    %124 = vector.extract_strided_slice %2 {offsets = [0, 9], sizes = [5, 1], strides = [1, 1]} : vector<5x10xf32> to vector<5x1xf32>
    %125 = vector.extract_strided_slice %68 {offsets = [9, 0], sizes = [1, 8], strides = [1, 1]} : vector<10x8xf32> to vector<1x8xf32>
    %126 = vector.broadcast %124 : vector<5x1xf32> to vector<5x8xf32>
    %127 = vector.broadcast %125 : vector<1x8xf32> to vector<5x8xf32>
    %128 = arith.mulf %126, %127 : vector<5x8xf32>
    %129 = arith.addf %123, %128 : vector<5x8xf32>
    %c0_9 = arith.constant 0 : index
    %c0_10 = arith.constant 0 : index
    %130 = vector.load %arg4[%c0_9, %c0_10] : memref<5x1xf32, #tpu.memory_space<vmem>>, vector<5x1xf32>
    %131 = vector.broadcast %130 : vector<5x1xf32> to vector<5x8xf32>
    %132 = arith.addf %129, %131 : vector<5x8xf32>
    %c0_11 = arith.constant 0 : index
    %c0_12 = arith.constant 0 : index
    %133 = vector.load %arg5[%c0_11, %c0_12] : memref<5x8xf32, #tpu.memory_space<vmem>>, vector<5x8xf32>
    tpu.vector_store %arg5[%c0_11, %c0_12], %132 {strides = array<i32>} : memref<5x8xf32, #tpu.memory_space<vmem>>, vector<5x8xf32>,
    return
  }
}

</mosaic_0001>

<llo_original>
// kernel: tpu_custom_call.1
$region0: #{tpu_custom_call.1}
  #allocation0 [shape = 'u32[]', space=smem, size = 0x4, offset = 0x4, fixed_abs, tag = 'smem constant byte address 0x4 - core index']
  #allocation1 [shape = 'u32[144,128]{1,0:T(1,128)}', space=vmem, size = 0x12000, scoped, tag = 'internal scratch']
  %s0 = inlined_call_operand.vmem [shape: f32[10,8], index: 0, kind: input, shape index: {}]
  %s1 = inlined_call_operand.vmem [shape: f32[10,10], index: 1, kind: input, shape index: {}]
  %s2 = inlined_call_operand.vmem [shape: f32[10,1], index: 2, kind: input, shape index: {}]
  %s3 = inlined_call_operand.vmem [shape: f32[5,10], index: 3, kind: input, shape index: {}]
  %s4 = inlined_call_operand.vmem [shape: f32[5,1], index: 4, kind: input, shape index: {}]
  %s5 = inlined_call_operand.hbm [shape: f32[5,8], index: 5, kind: output, shape index: {}]
  %s6 = sld [smem:[#allocation0]]
  $region30: #{tpu_custom_call.1} parent=0
    _
  %s8 = ssub.s32 1, %s6
  %s9 = scalar_select 0, %s8, %s6
  $region1: #{tpu_custom_call.1} parent=0
    #allocation2 [shape = 'u8[4096]{0}', space=vmem, size = 0x1000, scoped, tag = 'output window, operand 0, single buffered']
    #allocation3 [shape = 's32[1]{0}', space=sflag, size = 0x4, scoped, tag = 'scoped memory for tpu_custom_call.1']
    %10 = vsyncpa [#allocation3], 0
    // Predicated region
    $region2: #{tpu_custom_call.1} parent=1 // pred_check
      _
    $region3: #{tpu_custom_call.1} parent=1 // pred_check_branch
      %12 = sbr.rel (0) target = $region5
    $region4: #{tpu_custom_call.1} parent=1 // pred_region
      _
    $region5: #{tpu_custom_call.1} parent=1 // pred_fallthru
      _
    // Predicated region
    $region6: #{tpu_custom_call.1} parent=1 // pred_check
      _
    $region7: #{tpu_custom_call.1} parent=1 // pred_check_branch
      %14 = sbr.rel (0) target = $region9
    $region8: #{tpu_custom_call.1} parent=1 // pred_region
      _
    $region9: #{tpu_custom_call.1} parent=1 // pred_fallthru
      _
    // Predicated region
    $region10: #{tpu_custom_call.1} parent=1 // pred_check
      _
    $region11: #{tpu_custom_call.1} parent=1 // pred_check_branch
      %16 = sbr.rel (0) target = $region13
    $region12: #{tpu_custom_call.1} parent=1 // pred_region
      _
    $region13: #{tpu_custom_call.1} parent=1 // pred_fallthru
      _
    // Predicated region
    $region14: #{tpu_custom_call.1} parent=1 // pred_check
      _
    $region15: #{tpu_custom_call.1} parent=1 // pred_check_branch
      %18 = sbr.rel (0) target = $region17
    $region16: #{tpu_custom_call.1} parent=1 // pred_region
      _
    $region17: #{tpu_custom_call.1} parent=1 // pred_fallthru
      _
    // Predicated region
    $region18: #{tpu_custom_call.1} parent=1 // pred_check
      _
    $region19: #{tpu_custom_call.1} parent=1 // pred_check_branch
      %20 = sbr.rel (0) target = $region21
    $region20: #{tpu_custom_call.1} parent=1 // pred_region
      _
    $region21: #{tpu_custom_call.1} parent=1 // pred_fallthru
      _
    %v21 = vld [vmem:[%s0] sm:$0xff]
    %v22 = vld [vmem:[%s0 + $0x8] sm:$0x3]
    %v23 = vld [vmem:[%s1] sm:$0xff]
    %v24 = vld [vmem:[%s1 + $0x8] sm:$0x3]
    %v25 = vld [vmem:[%s3] sm:$0x1f]
    %27 = vset.pattern.permute.xlu0 0
    %28 = vperm.xlu0 %27, %v23
    %v29 = vpop.permute.xlu0 %28
    %32 = vset.pattern.permute.xlu0 0
    %33 = vperm.xlu0 %32, %v24
    %v34 = vpop.permute.xlu0 %33
    %v36 = vlaneseq
    %v37 = vshrl.u32 %v36, 7
    %v38 = vsub.s32 0, %v37
    %v39 = vrot.slane %v21, %v38
    %v40 = vmul.f32 %v29, %v39
    %v41 = vmul.f32 %v34, %v39
    %v42 = vadd.f32 %v40, 0.0
    %v43 = vadd.f32 %v41, 0.0
    %44 = vset.pattern.permute.xlu0 1
    %45 = vperm.xlu0 %44, %v23
    %v46 = vpop.permute.xlu0 %45
    %48 = vset.pattern.permute.xlu0 1
    %49 = vperm.xlu0 %48, %v24
    %v50 = vpop.permute.xlu0 %49
    %v52 = vlaneseq
    %v53 = vshrl.u32 %v52, 7
    %v54 = vsub.s32 1, %v53
    %v55 = vrot.slane %v21, %v54
    %v56 = vmul.f32 %v46, %v55
    %v57 = vmul.f32 %v50, %v55
    %v58 = vadd.f32 %v42, %v56
    %v59 = vadd.f32 %v43, %v57
    %60 = vset.pattern.permute.xlu0 2
    %61 = vperm.xlu0 %60, %v23
    %v62 = vpop.permute.xlu0 %61
    %64 = vset.pattern.permute.xlu0 2
    %65 = vperm.xlu0 %64, %v24
    %v66 = vpop.permute.xlu0 %65
    %v68 = vlaneseq
    %v69 = vshrl.u32 %v68, 7
    %v70 = vsub.s32 2, %v69
    %v71 = vrot.slane %v21, %v70
    %v72 = vmul.f32 %v62, %v71
    %v73 = vmul.f32 %v66, %v71
    %v74 = vadd.f32 %v58, %v72
    %v75 = vadd.f32 %v59, %v73
    %76 = vset.pattern.permute.xlu0 3
    %77 = vperm.xlu0 %76, %v23
    %v78 = vpop.permute.xlu0 %77
    %80 = vset.pattern.permute.xlu0 3
    %81 = vperm.xlu0 %80, %v24
    %v82 = vpop.permute.xlu0 %81
    %v84 = vlaneseq
    %v85 = vshrl.u32 %v84, 7
    %v86 = vsub.s32 3, %v85
    %v87 = vrot.slane %v21, %v86
    %v88 = vmul.f32 %v78, %v87
    %v89 = vmul.f32 %v82, %v87
    %v90 = vadd.f32 %v74, %v88
    %v91 = vadd.f32 %v75, %v89
    %92 = vset.pattern.permute.xlu0 4
    %93 = vperm.xlu0 %92, %v23
    %v94 = vpop.permute.xlu0 %93
    %96 = vset.pattern.permute.xlu0 4
    %97 = vperm.xlu0 %96, %v24
    %v98 = vpop.permute.xlu0 %97
    %v100 = vlaneseq
    %v101 = vshrl.u32 %v100, 7
    %v102 = vsub.s32 4, %v101
    %v103 = vrot.slane %v21, %v102
    %v104 = vmul.f32 %v94, %v103
    %v105 = vmul.f32 %v98, %v103
    %v106 = vadd.f32 %v90, %v104
    %v107 = vadd.f32 %v91, %v105
    %108 = vset.pattern.permute.xlu0 5
    %109 = vperm.xlu0 %108, %v23
    %v110 = vpop.permute.xlu0 %109
    %112 = vset.pattern.permute.xlu0 5
    %113 = vperm.xlu0 %112, %v24
    %v114 = vpop.permute.xlu0 %113
    %v116 = vlaneseq
    %v117 = vshrl.u32 %v116, 7
    %v118 = vsub.s32 5, %v117
    %v119 = vrot.slane %v21, %v118
    %v120 = vmul.f32 %v110, %v119
    %v121 = vmul.f32 %v114, %v119
    %v122 = vadd.f32 %v106, %v120
    %v123 = vadd.f32 %v107, %v121
    %124 = vset.pattern.permute.xlu0 6
    %125 = vperm.xlu0 %124, %v23
    %v126 = vpop.permute.xlu0 %125
    %128 = vset.pattern.permute.xlu0 6
    %129 = vperm.xlu0 %128, %v24
    %v130 = vpop.permute.xlu0 %129
    %v132 = vlaneseq
    %v133 = vshrl.u32 %v132, 7
    %v134 = vsub.s32 6, %v133
    %v135 = vrot.slane %v21, %v134
    %v136 = vmul.f32 %v126, %v135
    %v137 = vmul.f32 %v130, %v135
    %v138 = vadd.f32 %v122, %v136
    %v139 = vadd.f32 %v123, %v137
    %140 = vset.pattern.permute.xlu0 7
    %141 = vperm.xlu0 %140, %v23
    %v142 = vpop.permute.xlu0 %141
    %144 = vset.pattern.permute.xlu0 7
    %145 = vperm.xlu0 %144, %v24
    %v146 = vpop.permute.xlu0 %145
    %v148 = vlaneseq
    %v149 = vshrl.u32 %v148, 7
    %v150 = vsub.s32 7, %v149
    %v151 = vrot.slane %v21, %v150
    %v152 = vmul.f32 %v142, %v151
    %v153 = vmul.f32 %v146, %v151
    %v154 = vadd.f32 %v138, %v152
    %v155 = vadd.f32 %v139, %v153
    %156 = vset.pattern.permute.xlu0 8
    %157 = vperm.xlu0 %156, %v23
    %v158 = vpop.permute.xlu0 %157
    %160 = vset.pattern.permute.xlu0 8
    %161 = vperm.xlu0 %160, %v24
    %v162 = vpop.permute.xlu0 %161
    %v164 = vlaneseq
    %v165 = vshrl.u32 %v164, 7
    %v166 = vsub.s32 0, %v165
    %v167 = vrot.slane %v22, %v166
    %v168 = vmul.f32 %v158, %v167
    %v169 = vmul.f32 %v162, %v167
    %v170 = vadd.f32 %v154, %v168
    %v171 = vadd.f32 %v155, %v169
    %172 = vset.pattern.permute.xlu0 9
    %173 = vperm.xlu0 %172, %v23
    %v174 = vpop.permute.xlu0 %173
    %176 = vset.pattern.permute.xlu0 9
    %177 = vperm.xlu0 %176, %v24
    %v178 = vpop.permute.xlu0 %177
    %v180 = vlaneseq
    %v181 = vshrl.u32 %v180, 7
    %v182 = vsub.s32 1, %v181
    %v183 = vrot.slane %v22, %v182
    %v184 = vmul.f32 %v174, %v183
    %v185 = vmul.f32 %v178, %v183
    %v186 = vadd.f32 %v170, %v184
    %v187 = vadd.f32 %v171, %v185
    %v188 = vld [vmem:[%s2] sm:$0xff]
    %v189 = vld [vmem:[%s2 + $0x8] sm:$0x3]
    %191 = vset.pattern.permute.xlu0 0
    %192 = vperm.xlu0 %191, %v188
    %v193 = vpop.permute.xlu0 %192
    %196 = vset.pattern.permute.xlu0 0
    %197 = vperm.xlu0 %196, %v189
    %v198 = vpop.permute.xlu0 %197
    %v200 = vadd.f32 %v186, %v193
    %v201 = vadd.f32 %v187, %v198
    %v202 = vmax.f32 %v200, 0.0
    %v203 = vmax.f32 %v201, 0.0
    %205 = vset.pattern.permute.xlu0 0
    %206 = vperm.xlu0 %205, %v25
    %v207 = vpop.permute.xlu0 %206
    %v209 = vlaneseq
    %v210 = vshrl.u32 %v209, 7
    %v211 = vsub.s32 0, %v210
    %v212 = vrot.slane %v202, %v211
    %v213 = vmul.f32 %v207, %v212
    %v214 = vadd.f32 %v213, 0.0
    %215 = vset.pattern.permute.xlu0 1
    %216 = vperm.xlu0 %215, %v25
    %v217 = vpop.permute.xlu0 %216
    %v219 = vlaneseq
    %v220 = vshrl.u32 %v219, 7
    %v221 = vsub.s32 1, %v220
    %v222 = vrot.slane %v202, %v221
    %v223 = vmul.f32 %v217, %v222
    %v224 = vadd.f32 %v214, %v223
    %225 = vset.pattern.permute.xlu0 2
    %226 = vperm.xlu0 %225, %v25
    %v227 = vpop.permute.xlu0 %226
    %v229 = vlaneseq
    %v230 = vshrl.u32 %v229, 7
    %v231 = vsub.s32 2, %v230
    %v232 = vrot.slane %v202, %v231
    %v233 = vmul.f32 %v227, %v232
    %v234 = vadd.f32 %v224, %v233
    %235 = vset.pattern.permute.xlu0 3
    %236 = vperm.xlu0 %235, %v25
    %v237 = vpop.permute.xlu0 %236
    %v239 = vlaneseq
    %v240 = vshrl.u32 %v239, 7
    %v241 = vsub.s32 3, %v240
    %v242 = vrot.slane %v202, %v241
    %v243 = vmul.f32 %v237, %v242
    %v244 = vadd.f32 %v234, %v243
    %245 = vset.pattern.permute.xlu0 4
    %246 = vperm.xlu0 %245, %v25
    %v247 = vpop.permute.xlu0 %246
    %v249 = vlaneseq
    %v250 = vshrl.u32 %v249, 7
    %v251 = vsub.s32 4, %v250
    %v252 = vrot.slane %v202, %v251
    %v253 = vmul.f32 %v247, %v252
    %v254 = vadd.f32 %v244, %v253
    %255 = vset.pattern.permute.xlu0 5
    %256 = vperm.xlu0 %255, %v25
    %v257 = vpop.permute.xlu0 %256
    %v259 = vlaneseq
    %v260 = vshrl.u32 %v259, 7
    %v261 = vsub.s32 5, %v260
    %v262 = vrot.slane %v202, %v261
    %v263 = vmul.f32 %v257, %v262
    %v264 = vadd.f32 %v254, %v263
    %265 = vset.pattern.permute.xlu0 6
    %266 = vperm.xlu0 %265, %v25
    %v267 = vpop.permute.xlu0 %266
    %v269 = vlaneseq
    %v270 = vshrl.u32 %v269, 7
    %v271 = vsub.s32 6, %v270
    %v272 = vrot.slane %v202, %v271
    %v273 = vmul.f32 %v267, %v272
    %v274 = vadd.f32 %v264, %v273
    %275 = vset.pattern.permute.xlu0 7
    %276 = vperm.xlu0 %275, %v25
    %v277 = vpop.permute.xlu0 %276
    %v279 = vlaneseq
    %v280 = vshrl.u32 %v279, 7
    %v281 = vsub.s32 7, %v280
    %v282 = vrot.slane %v202, %v281
    %v283 = vmul.f32 %v277, %v282
    %v284 = vadd.f32 %v274, %v283
    %285 = vset.pattern.permute.xlu0 8
    %286 = vperm.xlu0 %285, %v25
    %v287 = vpop.permute.xlu0 %286
    %v289 = vlaneseq
    %v290 = vshrl.u32 %v289, 7
    %v291 = vsub.s32 0, %v290
    %v292 = vrot.slane %v203, %v291
    %v293 = vmul.f32 %v287, %v292
    %v294 = vadd.f32 %v284, %v293
    %295 = vset.pattern.permute.xlu0 9
    %296 = vperm.xlu0 %295, %v25
    %v297 = vpop.permute.xlu0 %296
    %v299 = vlaneseq
    %v300 = vshrl.u32 %v299, 7
    %v301 = vsub.s32 1, %v300
    %v302 = vrot.slane %v203, %v301
    %v303 = vmul.f32 %v297, %v302
    %v304 = vadd.f32 %v294, %v303
    %v305 = vld [vmem:[%s4] sm:$0x1f]
    %307 = vset.pattern.permute.xlu0 0
    %308 = vperm.xlu0 %307, %v305
    %v309 = vpop.permute.xlu0 %308
    %v311 = vadd.f32 %v304, %v309
    %vm312 = vcmask 61440
    %313 = vst.msk [vmem:[#allocation2] sm:$0x1f] %vm312, %v311
    // Predicated region
    $region22: #{tpu_custom_call.1} parent=1 // pred_check
      _
    $region23: #{tpu_custom_call.1} parent=1 // pred_check_branch
      %315 = sbr.rel (0) target = $region25
    $region24: #{tpu_custom_call.1} parent=1 // pred_region
      %s317 = ssub.s32 128, 128
      %318 = vsyncadd [#allocation3], %s317
      %s320 = sshll.u32 [#allocation2], 4
      %s321 = int_to_ptr.vmem [resolvable:$true] %s320
      %323 = dma.vmem_to_hbm [thread:$0]  %s321, 128, %s5, [#allocation3]
    $region25: #{tpu_custom_call.1} parent=1 // pred_fallthru
      _
    // Predicated region
    $region26: #{tpu_custom_call.1} parent=1 // pred_check
      _
    $region27: #{tpu_custom_call.1} parent=1 // pred_check_branch
      %325 = sbr.rel (0) target = $region29
    $region28: #{tpu_custom_call.1} parent=1 // pred_region
      %326 = dma.done [#allocation3], 128
    $region29: #{tpu_custom_call.1} parent=1 // pred_fallthru
      _
    %327 = vsyncpa [#allocation3], 1

</llo_original>
